<compile_context>
chip_gen: v5e
topology: v5e:2x2
jax: 0.10.0
libtpu: 0.0.40
codegen_flags: <defaults>
</compile_context>

<pallas_src>
import functools

import jax
import jax.numpy as jnp
from jax.experimental import pallas as pl
from jax.experimental.pallas import tpu as pltpu

_LANES = 128     # vreg lane width (last dim)
_SUBLANES = 8    # vreg sublane depth for f32 (2nd-last dim)


def _mlp_slab_kernel(n_hidden, x_ref, w1_ref, b1_ref, w2_ref, b2_ref, o_ref):
    """One (TILE_ROWS, 128) slab of Net.forward, entirely on the VPU.

      x_ref : (TILE_ROWS, 128) VMEM  batch as a dense lane-major slab
      w1_ref: (H,) SMEM              hidden-layer weight column (n_feature == 1)
      b1_ref: (H,) SMEM              hidden-layer bias
      w2_ref: (H,) SMEM              output-layer weight column (n_output == 1)
      b2_ref: (1,) SMEM              output-layer bias scalar
      o_ref : (TILE_ROWS, 128) VMEM  predictions, same slab layout

    K == 1 and N_out == 1 make both matmuls MXU-hostile, so the whole forward
    is an unrolled loop over the H hidden units: scalar weight from SMEM,
    VPU multiply-add + ReLU, accumulate.  No MXU, no XLU reduce, no lane
    broadcasts of weight columns.
    """
    x = x_ref[...]                                            # (TILE_ROWS, 128)
    acc = jnp.full(x.shape, b2_ref[0], dtype=jnp.float32)     # start from b2
    for h in range(n_hidden):          # trace-time unroll (H is small, e.g. 32)
        hid = jnp.maximum(x * w1_ref[h] + b1_ref[h], 0.0)     # layer 1 + ReLU
        acc = acc + hid * w2_ref[h]                           # layer 2 (dot w/ w2)
    o_ref[...] = acc.astype(o_ref.dtype)


def net_forward_slab(x_slab, w1, b1, w2, b2, *, tile_rows=1024):
    """Core Pallas call on the lane-major slab layout (no wrapper copies).

    x_slab: (n_rows, 128) float32 with n_rows a multiple of `tile_rows`
            (itself a multiple of 8).  Element (r, l) is one scalar input.
    Returns a (n_rows, 128) array with the per-element Net prediction.
    """
    n_rows, lanes = x_slab.shape
    assert lanes == _LANES, f"slab last dim must be {_LANES}"
    assert tile_rows > 0 and tile_rows % _SUBLANES == 0, \
        "tile_rows must be a positive multiple of 8"
    assert n_rows % tile_rows == 0, "n_rows must be a multiple of tile_rows"

    n_hidden = int(jnp.size(w1))
    w1_s = w1.reshape(n_hidden).astype(jnp.float32)   # (H,) -> SMEM
    b1_s = b1.reshape(n_hidden).astype(jnp.float32)   # (H,) -> SMEM
    w2_s = w2.reshape(n_hidden).astype(jnp.float32)   # (H,) -> SMEM
    b2_s = b2.reshape(1).astype(jnp.float32)          # (1,) -> SMEM

    kernel = functools.partial(_mlp_slab_kernel, n_hidden)
    grid = (n_rows // tile_rows,)

    # VMEM budget: double-buffered x/o tiles + a few full-tile f32 temporaries
    # ~= 7 * tile_rows * 128 * 4 B  (~3.5 MiB at tile_rows=1024) -- comfortably
    # below the 32 MiB scoped default on v6e/v7x, so no vmem_limit override.
    return pl.pallas_call(
        kernel,
        out_shape=jax.ShapeDtypeStruct((n_rows, _LANES), x_slab.dtype),
        grid=grid,
        in_specs=[
            pl.BlockSpec((tile_rows, _LANES), lambda i: (i, 0)),     # x slab tile
            pl.BlockSpec(memory_space=pltpu.MemorySpace.SMEM),       # w1 scalars
            pl.BlockSpec(memory_space=pltpu.MemorySpace.SMEM),       # b1 scalars
            pl.BlockSpec(memory_space=pltpu.MemorySpace.SMEM),       # w2 scalars
            pl.BlockSpec(memory_space=pltpu.MemorySpace.SMEM),       # b2 scalar
        ],
        out_specs=pl.BlockSpec((tile_rows, _LANES), lambda i: (i, 0)),
        compiler_params=pltpu.CompilerParams(
            # Output tiles are independent -> v7x may split steps across TCs.
            dimension_semantics=("parallel",)),
    )(x_slab, w1_s, b1_s, w2_s, b2_s)


def net_forward(x, w1, b1, w2, b2, *, tile_rows=1024):
    """PyTorch-shaped wrapper.

    x : (N, 1) float32, w1 : (1, H), b1 : (1, H) or (H,), w2 : (H, 1),
    b2 : (1, 1) or (1,).  Returns (N, 1) matching relu(x @ w1 + b1) @ w2 + b2.

    Callers that can keep their data in the (rows, 128) lane-major slab layout
    should call `net_forward_slab` directly and skip the pad/slice HBM passes.
    """
    n, n_feature = x.shape
    n_hidden = w1.shape[1]
    n_output = w2.shape[1]
    assert n_feature == 1 and n_output == 1, (
        "kernel is specialized to Net(n_feature=1, n_hidden, n_output=1)")

    # ---- tile selection --------------------------------------------------
    # Round the requested tile to sublane granularity (never below one (8,128)
    # vreg tile); shrink it only for tiny batches.  For awkward batch sizes pad
    # the batch UP to a tile multiple instead of shrinking the tile.
    tile_rows = max(_SUBLANES, (int(tile_rows) // _SUBLANES) * _SUBLANES)
    rows_needed = pl.cdiv(n, _LANES)
    rows_needed = pl.cdiv(rows_needed, _SUBLANES) * _SUBLANES
    tile_rows = min(tile_rows, rows_needed)
    n_rows = pl.cdiv(rows_needed, tile_rows) * tile_rows
    n_pad = n_rows * _LANES

    # One pad + reshape into the lane-major slab (single materialization).
    x_slab = jnp.pad(x.reshape(-1), (0, n_pad - n)).reshape(n_rows, _LANES)

    out_slab = net_forward_slab(x_slab, w1, b1, w2, b2, tile_rows=tile_rows)

    # Padded lanes compute relu(b1)*w2 + b2 garbage and are sliced off here.
    return out_slab.reshape(-1)[:n].reshape(n, n_output)


def init_params(key, n_feature, n_hidden, n_output, dtype=jnp.float32):
    """Deterministic init mimicking PyTorch nn.Linear default (uniform +-1/sqrt(fan_in))."""
    k1, k2, k3, k4 = jax.random.split(key, 4)
    bound1 = 1.0 / (n_feature ** 0.5)
    bound2 = 1.0 / (n_hidden ** 0.5)
    w1 = jax.random.uniform(k1, (n_feature, n_hidden), dtype, -bound1, bound1)
    b1 = jax.random.uniform(k2, (1, n_hidden), dtype, -bound1, bound1)
    w2 = jax.random.uniform(k3, (n_hidden, n_output), dtype, -bound2, bound2)
    b2 = jax.random.uniform(k4, (1, n_output), dtype, -bound2, bound2)
    return w1, b1, w2, b2


if __name__ == "__main__":
    # Shapes consistent with the module: x = linspace(-1, 1, 500).reshape(-1, 1),
    # Net(n_feature=1, n_hidden=32, n_output=1).
    N, n_feature, n_hidden, n_output = 500, 1, 32, 1

    key = jax.random.PRNGKey(0)
    x = jnp.linspace(-1.0, 1.0, N, dtype=jnp.float32).reshape(N, n_feature)
    w1, b1, w2, b2 = init_params(key, n_feature, n_hidden, n_output)

    out = net_forward(x, w1, b1, w2, b2)
    out = jax.block_until_ready(out)

    # Pure-JAX reference check of the forward semantics.
    ref = jnp.maximum(x @ w1 + b1, 0.0) @ w2 + b2
    assert out.shape == (N, n_output)
    assert jnp.allclose(out, ref, atol=1e-5, rtol=1e-5)

    # Second check: awkward large batch -> exercises the pad-up path and a
    # multi-step ("parallel") grid with the default big tile.
    N2 = 200_001
    x2 = jnp.linspace(-2.0, 2.0, N2, dtype=jnp.float32).reshape(N2, n_feature)
    out2 = jax.block_until_ready(net_forward(x2, w1, b1, w2, b2))
    ref2 = jnp.maximum(x2 @ w1 + b1, 0.0) @ w2 + b2
    assert out2.shape == (N2, n_output)
    assert jnp.allclose(out2, ref2, atol=1e-5, rtol=1e-5)

    print("KERNEL_OK")
</pallas_src>

<mosaic_0001>
module attributes {stable_mosaic.version = 11 : i64} {
  func.func @_mlp_slab_kernel(%arg0: i32, %arg1: memref<8x128xf32, #tpu.memory_space<vmem>>, %arg2: memref<32xf32, #tpu.memory_space<smem>>, %arg3: memref<32xf32, #tpu.memory_space<smem>>, %arg4: memref<32xf32, #tpu.memory_space<smem>>, %arg5: memref<1xf32, #tpu.memory_space<smem>>, %arg6: memref<8x128xf32, #tpu.memory_space<vmem>>) attributes {dimension_semantics = [#tpu.dimension_semantics<parallel>], iteration_bounds = array<i64: 1>, scalar_prefetch = 0 : i64, scratch_operands = 0 : i64, tpu.core_type = #tpu.core_type<tc>, window_params = [{transform_indices = @transform_0, window_bounds = array<i64: 8, 128>}, {transform_indices = @transform_1, window_bounds = array<i64: 32>}, {transform_indices = @transform_2, window_bounds = array<i64: 32>}, {transform_indices = @transform_3, window_bounds = array<i64: 32>}, {transform_indices = @transform_4, window_bounds = array<i64: 1>}, {transform_indices = @transform_5, window_bounds = array<i64: 8, 128>}]} {
    %c0 = arith.constant 0 : index
    %c0_0 = arith.constant 0 : index
    %0 = vector.load %arg1[%c0, %c0_0] : memref<8x128xf32, #tpu.memory_space<vmem>>, vector<8x128xf32>
    %c0_1 = arith.constant 0 : index
    %1 = memref.load %arg5[%c0_1] : memref<1xf32, #tpu.memory_space<smem>>
    %2 = vector.broadcast %1 : f32 to vector<8x128xf32>
    %c0_2 = arith.constant 0 : index
    %3 = memref.load %arg2[%c0_2] : memref<32xf32, #tpu.memory_space<smem>>
    %4 = vector.broadcast %3 : f32 to vector<8x128xf32>
    %5 = arith.mulf %0, %4 : vector<8x128xf32>
    %c0_3 = arith.constant 0 : index
    %6 = memref.load %arg3[%c0_3] : memref<32xf32, #tpu.memory_space<smem>>
    %7 = vector.broadcast %6 : f32 to vector<8x128xf32>
    %8 = arith.addf %5, %7 : vector<8x128xf32>
    %cst = arith.constant 0.000000e+00 : f32
    %9 = vector.broadcast %cst : f32 to vector<8x128xf32>
    %10 = arith.maximumf %8, %9 : vector<8x128xf32>
    %c0_4 = arith.constant 0 : index
    %11 = memref.load %arg4[%c0_4] : memref<32xf32, #tpu.memory_space<smem>>
    %12 = vector.broadcast %11 : f32 to vector<8x128xf32>
    %13 = arith.mulf %10, %12 : vector<8x128xf32>
    %14 = arith.addf %2, %13 : vector<8x128xf32>
    %c1 = arith.constant 1 : index
    %15 = memref.load %arg2[%c1] : memref<32xf32, #tpu.memory_space<smem>>
    %16 = vector.broadcast %15 : f32 to vector<8x128xf32>
    %17 = arith.mulf %0, %16 : vector<8x128xf32>
    %c1_5 = arith.constant 1 : index
    %18 = memref.load %arg3[%c1_5] : memref<32xf32, #tpu.memory_space<smem>>
    %19 = vector.broadcast %18 : f32 to vector<8x128xf32>
    %20 = arith.addf %17, %19 : vector<8x128xf32>
    %cst_6 = arith.constant 0.000000e+00 : f32
    %21 = vector.broadcast %cst_6 : f32 to vector<8x128xf32>
    %22 = arith.maximumf %20, %21 : vector<8x128xf32>
    %c1_7 = arith.constant 1 : index
    %23 = memref.load %arg4[%c1_7] : memref<32xf32, #tpu.memory_space<smem>>
    %24 = vector.broadcast %23 : f32 to vector<8x128xf32>
    %25 = arith.mulf %22, %24 : vector<8x128xf32>
    %26 = arith.addf %14, %25 : vector<8x128xf32>
    %c2 = arith.constant 2 : index
    %27 = memref.load %arg2[%c2] : memref<32xf32, #tpu.memory_space<smem>>
    %28 = vector.broadcast %27 : f32 to vector<8x128xf32>
    %29 = arith.mulf %0, %28 : vector<8x128xf32>
    %c2_8 = arith.constant 2 : index
    %30 = memref.load %arg3[%c2_8] : memref<32xf32, #tpu.memory_space<smem>>
    %31 = vector.broadcast %30 : f32 to vector<8x128xf32>
    %32 = arith.addf %29, %31 : vector<8x128xf32>
    %cst_9 = arith.constant 0.000000e+00 : f32
    %33 = vector.broadcast %cst_9 : f32 to vector<8x128xf32>
    %34 = arith.maximumf %32, %33 : vector<8x128xf32>
    %c2_10 = arith.constant 2 : index
    %35 = memref.load %arg4[%c2_10] : memref<32xf32, #tpu.memory_space<smem>>
    %36 = vector.broadcast %35 : f32 to vector<8x128xf32>
    %37 = arith.mulf %34, %36 : vector<8x128xf32>
    %38 = arith.addf %26, %37 : vector<8x128xf32>
    %c3 = arith.constant 3 : index
    %39 = memref.load %arg2[%c3] : memref<32xf32, #tpu.memory_space<smem>>
    %40 = vector.broadcast %39 : f32 to vector<8x128xf32>
    %41 = arith.mulf %0, %40 : vector<8x128xf32>
    %c3_11 = arith.constant 3 : index
    %42 = memref.load %arg3[%c3_11] : memref<32xf32, #tpu.memory_space<smem>>
    %43 = vector.broadcast %42 : f32 to vector<8x128xf32>
    %44 = arith.addf %41, %43 : vector<8x128xf32>
    %cst_12 = arith.constant 0.000000e+00 : f32
    %45 = vector.broadcast %cst_12 : f32 to vector<8x128xf32>
    %46 = arith.maximumf %44, %45 : vector<8x128xf32>
    %c3_13 = arith.constant 3 : index
    %47 = memref.load %arg4[%c3_13] : memref<32xf32, #tpu.memory_space<smem>>
    %48 = vector.broadcast %47 : f32 to vector<8x128xf32>
    %49 = arith.mulf %46, %48 : vector<8x128xf32>
    %50 = arith.addf %38, %49 : vector<8x128xf32>
    %c4 = arith.constant 4 : index
    %51 = memref.load %arg2[%c4] : memref<32xf32, #tpu.memory_space<smem>>
    %52 = vector.broadcast %51 : f32 to vector<8x128xf32>
    %53 = arith.mulf %0, %52 : vector<8x128xf32>
    %c4_14 = arith.constant 4 : index
    %54 = memref.load %arg3[%c4_14] : memref<32xf32, #tpu.memory_space<smem>>
    %55 = vector.broadcast %54 : f32 to vector<8x128xf32>
    %56 = arith.addf %53, %55 : vector<8x128xf32>
    %cst_15 = arith.constant 0.000000e+00 : f32
    %57 = vector.broadcast %cst_15 : f32 to vector<8x128xf32>
    %58 = arith.maximumf %56, %57 : vector<8x128xf32>
    %c4_16 = arith.constant 4 : index
    %59 = memref.load %arg4[%c4_16] : memref<32xf32, #tpu.memory_space<smem>>
    %60 = vector.broadcast %59 : f32 to vector<8x128xf32>
    %61 = arith.mulf %58, %60 : vector<8x128xf32>
    %62 = arith.addf %50, %61 : vector<8x128xf32>
    %c5 = arith.constant 5 : index
    %63 = memref.load %arg2[%c5] : memref<32xf32, #tpu.memory_space<smem>>
    %64 = vector.broadcast %63 : f32 to vector<8x128xf32>
    %65 = arith.mulf %0, %64 : vector<8x128xf32>
    %c5_17 = arith.constant 5 : index
    %66 = memref.load %arg3[%c5_17] : memref<32xf32, #tpu.memory_space<smem>>
    %67 = vector.broadcast %66 : f32 to vector<8x128xf32>
    %68 = arith.addf %65, %67 : vector<8x128xf32>
    %cst_18 = arith.constant 0.000000e+00 : f32
    %69 = vector.broadcast %cst_18 : f32 to vector<8x128xf32>
    %70 = arith.maximumf %68, %69 : vector<8x128xf32>
    %c5_19 = arith.constant 5 : index
    %71 = memref.load %arg4[%c5_19] : memref<32xf32, #tpu.memory_space<smem>>
    %72 = vector.broadcast %71 : f32 to vector<8x128xf32>
    %73 = arith.mulf %70, %72 : vector<8x128xf32>
    %74 = arith.addf %62, %73 : vector<8x128xf32>
    %c6 = arith.constant 6 : index
    %75 = memref.load %arg2[%c6] : memref<32xf32, #tpu.memory_space<smem>>
    %76 = vector.broadcast %75 : f32 to vector<8x128xf32>
    %77 = arith.mulf %0, %76 : vector<8x128xf32>
    %c6_20 = arith.constant 6 : index
    %78 = memref.load %arg3[%c6_20] : memref<32xf32, #tpu.memory_space<smem>>
    %79 = vector.broadcast %78 : f32 to vector<8x128xf32>
    %80 = arith.addf %77, %79 : vector<8x128xf32>
    %cst_21 = arith.constant 0.000000e+00 : f32
    %81 = vector.broadcast %cst_21 : f32 to vector<8x128xf32>
    %82 = arith.maximumf %80, %81 : vector<8x128xf32>
    %c6_22 = arith.constant 6 : index
    %83 = memref.load %arg4[%c6_22] : memref<32xf32, #tpu.memory_space<smem>>
    %84 = vector.broadcast %83 : f32 to vector<8x128xf32>
    %85 = arith.mulf %82, %84 : vector<8x128xf32>
    %86 = arith.addf %74, %85 : vector<8x128xf32>
    %c7 = arith.constant 7 : index
    %87 = memref.load %arg2[%c7] : memref<32xf32, #tpu.memory_space<smem>>
    %88 = vector.broadcast %87 : f32 to vector<8x128xf32>
    %89 = arith.mulf %0, %88 : vector<8x128xf32>
    %c7_23 = arith.constant 7 : index
    %90 = memref.load %arg3[%c7_23] : memref<32xf32, #tpu.memory_space<smem>>
    %91 = vector.broadcast %90 : f32 to vector<8x128xf32>
    %92 = arith.addf %89, %91 : vector<8x128xf32>
    %cst_24 = arith.constant 0.000000e+00 : f32
    %93 = vector.broadcast %cst_24 : f32 to vector<8x128xf32>
    %94 = arith.maximumf %92, %93 : vector<8x128xf32>
    %c7_25 = arith.constant 7 : index
    %95 = memref.load %arg4[%c7_25] : memref<32xf32, #tpu.memory_space<smem>>
    %96 = vector.broadcast %95 : f32 to vector<8x128xf32>
    %97 = arith.mulf %94, %96 : vector<8x128xf32>
    %98 = arith.addf %86, %97 : vector<8x128xf32>
    %c8 = arith.constant 8 : index
    %99 = memref.load %arg2[%c8] : memref<32xf32, #tpu.memory_space<smem>>
    %100 = vector.broadcast %99 : f32 to vector<8x128xf32>
    %101 = arith.mulf %0, %100 : vector<8x128xf32>
    %c8_26 = arith.constant 8 : index
    %102 = memref.load %arg3[%c8_26] : memref<32xf32, #tpu.memory_space<smem>>
    %103 = vector.broadcast %102 : f32 to vector<8x128xf32>
    %104 = arith.addf %101, %103 : vector<8x128xf32>
    %cst_27 = arith.constant 0.000000e+00 : f32
    %105 = vector.broadcast %cst_27 : f32 to vector<8x128xf32>
    %106 = arith.maximumf %104, %105 : vector<8x128xf32>
    %c8_28 = arith.constant 8 : index
    %107 = memref.load %arg4[%c8_28] : memref<32xf32, #tpu.memory_space<smem>>
    %108 = vector.broadcast %107 : f32 to vector<8x128xf32>
    %109 = arith.mulf %106, %108 : vector<8x128xf32>
    %110 = arith.addf %98, %109 : vector<8x128xf32>
    %c9 = arith.constant 9 : index
    %111 = memref.load %arg2[%c9] : memref<32xf32, #tpu.memory_space<smem>>
    %112 = vector.broadcast %111 : f32 to vector<8x128xf32>
    %113 = arith.mulf %0, %112 : vector<8x128xf32>
    %c9_29 = arith.constant 9 : index
    %114 = memref.load %arg3[%c9_29] : memref<32xf32, #tpu.memory_space<smem>>
    %115 = vector.broadcast %114 : f32 to vector<8x128xf32>
    %116 = arith.addf %113, %115 : vector<8x128xf32>
    %cst_30 = arith.constant 0.000000e+00 : f32
    %117 = vector.broadcast %cst_30 : f32 to vector<8x128xf32>
    %118 = arith.maximumf %116, %117 : vector<8x128xf32>
    %c9_31 = arith.constant 9 : index
    %119 = memref.load %arg4[%c9_31] : memref<32xf32, #tpu.memory_space<smem>>
    %120 = vector.broadcast %119 : f32 to vector<8x128xf32>
    %121 = arith.mulf %118, %120 : vector<8x128xf32>
    %122 = arith.addf %110, %121 : vector<8x128xf32>
    %c10 = arith.constant 10 : index
    %123 = memref.load %arg2[%c10] : memref<32xf32, #tpu.memory_space<smem>>
    %124 = vector.broadcast %123 : f32 to vector<8x128xf32>
    %125 = arith.mulf %0, %124 : vector<8x128xf32>
    %c10_32 = arith.constant 10 : index
    %126 = memref.load %arg3[%c10_32] : memref<32xf32, #tpu.memory_space<smem>>
    %127 = vector.broadcast %126 : f32 to vector<8x128xf32>
    %128 = arith.addf %125, %127 : vector<8x128xf32>
    %cst_33 = arith.constant 0.000000e+00 : f32
    %129 = vector.broadcast %cst_33 : f32 to vector<8x128xf32>
    %130 = arith.maximumf %128, %129 : vector<8x128xf32>
    %c10_34 = arith.constant 10 : index
    %131 = memref.load %arg4[%c10_34] : memref<32xf32, #tpu.memory_space<smem>>
    %132 = vector.broadcast %131 : f32 to vector<8x128xf32>
    %133 = arith.mulf %130, %132 : vector<8x128xf32>
    %134 = arith.addf %122, %133 : vector<8x128xf32>
    %c11 = arith.constant 11 : index
    %135 = memref.load %arg2[%c11] : memref<32xf32, #tpu.memory_space<smem>>
    %136 = vector.broadcast %135 : f32 to vector<8x128xf32>
    %137 = arith.mulf %0, %136 : vector<8x128xf32>
    %c11_35 = arith.constant 11 : index
    %138 = memref.load %arg3[%c11_35] : memref<32xf32, #tpu.memory_space<smem>>
    %139 = vector.broadcast %138 : f32 to vector<8x128xf32>
    %140 = arith.addf %137, %139 : vector<8x128xf32>
    %cst_36 = arith.constant 0.000000e+00 : f32
    %141 = vector.broadcast %cst_36 : f32 to vector<8x128xf32>
    %142 = arith.maximumf %140, %141 : vector<8x128xf32>
    %c11_37 = arith.constant 11 : index
    %143 = memref.load %arg4[%c11_37] : memref<32xf32, #tpu.memory_space<smem>>
    %144 = vector.broadcast %143 : f32 to vector<8x128xf32>
    %145 = arith.mulf %142, %144 : vector<8x128xf32>
    %146 = arith.addf %134, %145 : vector<8x128xf32>
    %c12 = arith.constant 12 : index
    %147 = memref.load %arg2[%c12] : memref<32xf32, #tpu.memory_space<smem>>
    %148 = vector.broadcast %147 : f32 to vector<8x128xf32>
    %149 = arith.mulf %0, %148 : vector<8x128xf32>
    %c12_38 = arith.constant 12 : index
    %150 = memref.load %arg3[%c12_38] : memref<32xf32, #tpu.memory_space<smem>>
    %151 = vector.broadcast %150 : f32 to vector<8x128xf32>
    %152 = arith.addf %149, %151 : vector<8x128xf32>
    %cst_39 = arith.constant 0.000000e+00 : f32
    %153 = vector.broadcast %cst_39 : f32 to vector<8x128xf32>
    %154 = arith.maximumf %152, %153 : vector<8x128xf32>
    %c12_40 = arith.constant 12 : index
    %155 = memref.load %arg4[%c12_40] : memref<32xf32, #tpu.memory_space<smem>>
    %156 = vector.broadcast %155 : f32 to vector<8x128xf32>
    %157 = arith.mulf %154, %156 : vector<8x128xf32>
    %158 = arith.addf %146, %157 : vector<8x128xf32>
    %c13 = arith.constant 13 : index
    %159 = memref.load %arg2[%c13] : memref<32xf32, #tpu.memory_space<smem>>
    %160 = vector.broadcast %159 : f32 to vector<8x128xf32>
    %161 = arith.mulf %0, %160 : vector<8x128xf32>
    %c13_41 = arith.constant 13 : index
    %162 = memref.load %arg3[%c13_41] : memref<32xf32, #tpu.memory_space<smem>>
    %163 = vector.broadcast %162 : f32 to vector<8x128xf32>
    %164 = arith.addf %161, %163 : vector<8x128xf32>
    %cst_42 = arith.constant 0.000000e+00 : f32
    %165 = vector.broadcast %cst_42 : f32 to vector<8x128xf32>
    %166 = arith.maximumf %164, %165 : vector<8x128xf32>
    %c13_43 = arith.constant 13 : index
    %167 = memref.load %arg4[%c13_43] : memref<32xf32, #tpu.memory_space<smem>>
    %168 = vector.broadcast %167 : f32 to vector<8x128xf32>
    %169 = arith.mulf %166, %168 : vector<8x128xf32>
    %170 = arith.addf %158, %169 : vector<8x128xf32>
    %c14 = arith.constant 14 : index
    %171 = memref.load %arg2[%c14] : memref<32xf32, #tpu.memory_space<smem>>
    %172 = vector.broadcast %171 : f32 to vector<8x128xf32>
    %173 = arith.mulf %0, %172 : vector<8x128xf32>
    %c14_44 = arith.constant 14 : index
    %174 = memref.load %arg3[%c14_44] : memref<32xf32, #tpu.memory_space<smem>>
    %175 = vector.broadcast %174 : f32 to vector<8x128xf32>
    %176 = arith.addf %173, %175 : vector<8x128xf32>
    %cst_45 = arith.constant 0.000000e+00 : f32
    %177 = vector.broadcast %cst_45 : f32 to vector<8x128xf32>
    %178 = arith.maximumf %176, %177 : vector<8x128xf32>
    %c14_46 = arith.constant 14 : index
    %179 = memref.load %arg4[%c14_46] : memref<32xf32, #tpu.memory_space<smem>>
    %180 = vector.broadcast %179 : f32 to vector<8x128xf32>
    %181 = arith.mulf %178, %180 : vector<8x128xf32>
    %182 = arith.addf %170, %181 : vector<8x128xf32>
    %c15 = arith.constant 15 : index
    %183 = memref.load %arg2[%c15] : memref<32xf32, #tpu.memory_space<smem>>
    %184 = vector.broadcast %183 : f32 to vector<8x128xf32>
    %185 = arith.mulf %0, %184 : vector<8x128xf32>
    %c15_47 = arith.constant 15 : index
    %186 = memref.load %arg3[%c15_47] : memref<32xf32, #tpu.memory_space<smem>>
    %187 = vector.broadcast %186 : f32 to vector<8x128xf32>
    %188 = arith.addf %185, %187 : vector<8x128xf32>
    %cst_48 = arith.constant 0.000000e+00 : f32
    %189 = vector.broadcast %cst_48 : f32 to vector<8x128xf32>
    %190 = arith.maximumf %188, %189 : vector<8x128xf32>
    %c15_49 = arith.constant 15 : index
    %191 = memref.load %arg4[%c15_49] : memref<32xf32, #tpu.memory_space<smem>>
    %192 = vector.broadcast %191 : f32 to vector<8x128xf32>
    %193 = arith.mulf %190, %192 : vector<8x128xf32>
    %194 = arith.addf %182, %193 : vector<8x128xf32>
    %c16 = arith.constant 16 : index
    %195 = memref.load %arg2[%c16] : memref<32xf32, #tpu.memory_space<smem>>
    %196 = vector.broadcast %195 : f32 to vector<8x128xf32>
    %197 = arith.mulf %0, %196 : vector<8x128xf32>
    %c16_50 = arith.constant 16 : index
    %198 = memref.load %arg3[%c16_50] : memref<32xf32, #tpu.memory_space<smem>>
    %199 = vector.broadcast %198 : f32 to vector<8x128xf32>
    %200 = arith.addf %197, %199 : vector<8x128xf32>
    %cst_51 = arith.constant 0.000000e+00 : f32
    %201 = vector.broadcast %cst_51 : f32 to vector<8x128xf32>
    %202 = arith.maximumf %200, %201 : vector<8x128xf32>
    %c16_52 = arith.constant 16 : index
    %203 = memref.load %arg4[%c16_52] : memref<32xf32, #tpu.memory_space<smem>>
    %204 = vector.broadcast %203 : f32 to vector<8x128xf32>
    %205 = arith.mulf %202, %204 : vector<8x128xf32>
    %206 = arith.addf %194, %205 : vector<8x128xf32>
    %c17 = arith.constant 17 : index
    %207 = memref.load %arg2[%c17] : memref<32xf32, #tpu.memory_space<smem>>
    %208 = vector.broadcast %207 : f32 to vector<8x128xf32>
    %209 = arith.mulf %0, %208 : vector<8x128xf32>
    %c17_53 = arith.constant 17 : index
    %210 = memref.load %arg3[%c17_53] : memref<32xf32, #tpu.memory_space<smem>>
    %211 = vector.broadcast %210 : f32 to vector<8x128xf32>
    %212 = arith.addf %209, %211 : vector<8x128xf32>
    %cst_54 = arith.constant 0.000000e+00 : f32
    %213 = vector.broadcast %cst_54 : f32 to vector<8x128xf32>
    %214 = arith.maximumf %212, %213 : vector<8x128xf32>
    %c17_55 = arith.constant 17 : index
    %215 = memref.load %arg4[%c17_55] : memref<32xf32, #tpu.memory_space<smem>>
    %216 = vector.broadcast %215 : f32 to vector<8x128xf32>
    %217 = arith.mulf %214, %216 : vector<8x128xf32>
    %218 = arith.addf %206, %217 : vector<8x128xf32>
    %c18 = arith.constant 18 : index
    %219 = memref.load %arg2[%c18] : memref<32xf32, #tpu.memory_space<smem>>
    %220 = vector.broadcast %219 : f32 to vector<8x128xf32>
    %221 = arith.mulf %0, %220 : vector<8x128xf32>
    %c18_56 = arith.constant 18 : index
    %222 = memref.load %arg3[%c18_56] : memref<32xf32, #tpu.memory_space<smem>>
    %223 = vector.broadcast %222 : f32 to vector<8x128xf32>
    %224 = arith.addf %221, %223 : vector<8x128xf32>
    %cst_57 = arith.constant 0.000000e+00 : f32
    %225 = vector.broadcast %cst_57 : f32 to vector<8x128xf32>
    %226 = arith.maximumf %224, %225 : vector<8x128xf32>
    %c18_58 = arith.constant 18 : index
    %227 = memref.load %arg4[%c18_58] : memref<32xf32, #tpu.memory_space<smem>>
    %228 = vector.broadcast %227 : f32 to vector<8x128xf32>
    %229 = arith.mulf %226, %228 : vector<8x128xf32>
    %230 = arith.addf %218, %229 : vector<8x128xf32>
    %c19 = arith.constant 19 : index
    %231 = memref.load %arg2[%c19] : memref<32xf32, #tpu.memory_space<smem>>
    %232 = vector.broadcast %231 : f32 to vector<8x128xf32>
    %233 = arith.mulf %0, %232 : vector<8x128xf32>
    %c19_59 = arith.constant 19 : index
    %234 = memref.load %arg3[%c19_59] : memref<32xf32, #tpu.memory_space<smem>>
    %235 = vector.broadcast %234 : f32 to vector<8x128xf32>
    %236 = arith.addf %233, %235 : vector<8x128xf32>
    %cst_60 = arith.constant 0.000000e+00 : f32
    %237 = vector.broadcast %cst_60 : f32 to vector<8x128xf32>
    %238 = arith.maximumf %236, %237 : vector<8x128xf32>
    %c19_61 = arith.constant 19 : index
    %239 = memref.load %arg4[%c19_61] : memref<32xf32, #tpu.memory_space<smem>>
    %240 = vector.broadcast %239 : f32 to vector<8x128xf32>
    %241 = arith.mulf %238, %240 : vector<8x128xf32>
    %242 = arith.addf %230, %241 : vector<8x128xf32>
    %c20 = arith.constant 20 : index
    %243 = memref.load %arg2[%c20] : memref<32xf32, #tpu.memory_space<smem>>
    %244 = vector.broadcast %243 : f32 to vector<8x128xf32>
    %245 = arith.mulf %0, %244 : vector<8x128xf32>
    %c20_62 = arith.constant 20 : index
    %246 = memref.load %arg3[%c20_62] : memref<32xf32, #tpu.memory_space<smem>>
    %247 = vector.broadcast %246 : f32 to vector<8x128xf32>
    %248 = arith.addf %245, %247 : vector<8x128xf32>
    %cst_63 = arith.constant 0.000000e+00 : f32
    %249 = vector.broadcast %cst_63 : f32 to vector<8x128xf32>
    %250 = arith.maximumf %248, %249 : vector<8x128xf32>
    %c20_64 = arith.constant 20 : index
    %251 = memref.load %arg4[%c20_64] : memref<32xf32, #tpu.memory_space<smem>>
    %252 = vector.broadcast %251 : f32 to vector<8x128xf32>
    %253 = arith.mulf %250, %252 : vector<8x128xf32>
    %254 = arith.addf %242, %253 : vector<8x128xf32>
    %c21 = arith.constant 21 : index
    %255 = memref.load %arg2[%c21] : memref<32xf32, #tpu.memory_space<smem>>
    %256 = vector.broadcast %255 : f32 to vector<8x128xf32>
    %257 = arith.mulf %0, %256 : vector<8x128xf32>
    %c21_65 = arith.constant 21 : index
    %258 = memref.load %arg3[%c21_65] : memref<32xf32, #tpu.memory_space<smem>>
    %259 = vector.broadcast %258 : f32 to vector<8x128xf32>
    %260 = arith.addf %257, %259 : vector<8x128xf32>
    %cst_66 = arith.constant 0.000000e+00 : f32
    %261 = vector.broadcast %cst_66 : f32 to vector<8x128xf32>
    %262 = arith.maximumf %260, %261 : vector<8x128xf32>
    %c21_67 = arith.constant 21 : index
    %263 = memref.load %arg4[%c21_67] : memref<32xf32, #tpu.memory_space<smem>>
    %264 = vector.broadcast %263 : f32 to vector<8x128xf32>
    %265 = arith.mulf %262, %264 : vector<8x128xf32>
    %266 = arith.addf %254, %265 : vector<8x128xf32>
    %c22 = arith.constant 22 : index
    %267 = memref.load %arg2[%c22] : memref<32xf32, #tpu.memory_space<smem>>
    %268 = vector.broadcast %267 : f32 to vector<8x128xf32>
    %269 = arith.mulf %0, %268 : vector<8x128xf32>
    %c22_68 = arith.constant 22 : index
    %270 = memref.load %arg3[%c22_68] : memref<32xf32, #tpu.memory_space<smem>>
    %271 = vector.broadcast %270 : f32 to vector<8x128xf32>
    %272 = arith.addf %269, %271 : vector<8x128xf32>
    %cst_69 = arith.constant 0.000000e+00 : f32
    %273 = vector.broadcast %cst_69 : f32 to vector<8x128xf32>
    %274 = arith.maximumf %272, %273 : vector<8x128xf32>
    %c22_70 = arith.constant 22 : index
    %275 = memref.load %arg4[%c22_70] : memref<32xf32, #tpu.memory_space<smem>>
    %276 = vector.broadcast %275 : f32 to vector<8x128xf32>
    %277 = arith.mulf %274, %276 : vector<8x128xf32>
    %278 = arith.addf %266, %277 : vector<8x128xf32>
    %c23 = arith.constant 23 : index
    %279 = memref.load %arg2[%c23] : memref<32xf32, #tpu.memory_space<smem>>
    %280 = vector.broadcast %279 : f32 to vector<8x128xf32>
    %281 = arith.mulf %0, %280 : vector<8x128xf32>
    %c23_71 = arith.constant 23 : index
    %282 = memref.load %arg3[%c23_71] : memref<32xf32, #tpu.memory_space<smem>>
    %283 = vector.broadcast %282 : f32 to vector<8x128xf32>
    %284 = arith.addf %281, %283 : vector<8x128xf32>
    %cst_72 = arith.constant 0.000000e+00 : f32
    %285 = vector.broadcast %cst_72 : f32 to vector<8x128xf32>
    %286 = arith.maximumf %284, %285 : vector<8x128xf32>
    %c23_73 = arith.constant 23 : index
    %287 = memref.load %arg4[%c23_73] : memref<32xf32, #tpu.memory_space<smem>>
    %288 = vector.broadcast %287 : f32 to vector<8x128xf32>
    %289 = arith.mulf %286, %288 : vector<8x128xf32>
    %290 = arith.addf %278, %289 : vector<8x128xf32>
    %c24 = arith.constant 24 : index
    %291 = memref.load %arg2[%c24] : memref<32xf32, #tpu.memory_space<smem>>
    %292 = vector.broadcast %291 : f32 to vector<8x128xf32>
    %293 = arith.mulf %0, %292 : vector<8x128xf32>
    %c24_74 = arith.constant 24 : index
    %294 = memref.load %arg3[%c24_74] : memref<32xf32, #tpu.memory_space<smem>>
    %295 = vector.broadcast %294 : f32 to vector<8x128xf32>
    %296 = arith.addf %293, %295 : vector<8x128xf32>
    %cst_75 = arith.constant 0.000000e+00 : f32
    %297 = vector.broadcast %cst_75 : f32 to vector<8x128xf32>
    %298 = arith.maximumf %296, %297 : vector<8x128xf32>
    %c24_76 = arith.constant 24 : index
    %299 = memref.load %arg4[%c24_76] : memref<32xf32, #tpu.memory_space<smem>>
    %300 = vector.broadcast %299 : f32 to vector<8x128xf32>
    %301 = arith.mulf %298, %300 : vector<8x128xf32>
    %302 = arith.addf %290, %301 : vector<8x128xf32>
    %c25 = arith.constant 25 : index
    %303 = memref.load %arg2[%c25] : memref<32xf32, #tpu.memory_space<smem>>
    %304 = vector.broadcast %303 : f32 to vector<8x128xf32>
    %305 = arith.mulf %0, %304 : vector<8x128xf32>
    %c25_77 = arith.constant 25 : index
    %306 = memref.load %arg3[%c25_77] : memref<32xf32, #tpu.memory_space<smem>>
    %307 = vector.broadcast %306 : f32 to vector<8x128xf32>
    %308 = arith.addf %305, %307 : vector<8x128xf32>
    %cst_78 = arith.constant 0.000000e+00 : f32
    %309 = vector.broadcast %cst_78 : f32 to vector<8x128xf32>
    %310 = arith.maximumf %308, %309 : vector<8x128xf32>
    %c25_79 = arith.constant 25 : index
    %311 = memref.load %arg4[%c25_79] : memref<32xf32, #tpu.memory_space<smem>>
    %312 = vector.broadcast %311 : f32 to vector<8x128xf32>
    %313 = arith.mulf %310, %312 : vector<8x128xf32>
    %314 = arith.addf %302, %313 : vector<8x128xf32>
    %c26 = arith.constant 26 : index
    %315 = memref.load %arg2[%c26] : memref<32xf32, #tpu.memory_space<smem>>
    %316 = vector.broadcast %315 : f32 to vector<8x128xf32>
    %317 = arith.mulf %0, %316 : vector<8x128xf32>
    %c26_80 = arith.constant 26 : index
    %318 = memref.load %arg3[%c26_80] : memref<32xf32, #tpu.memory_space<smem>>
    %319 = vector.broadcast %318 : f32 to vector<8x128xf32>
    %320 = arith.addf %317, %319 : vector<8x128xf32>
    %cst_81 = arith.constant 0.000000e+00 : f32
    %321 = vector.broadcast %cst_81 : f32 to vector<8x128xf32>
    %322 = arith.maximumf %320, %321 : vector<8x128xf32>
    %c26_82 = arith.constant 26 : index
    %323 = memref.load %arg4[%c26_82] : memref<32xf32, #tpu.memory_space<smem>>
    %324 = vector.broadcast %323 : f32 to vector<8x128xf32>
    %325 = arith.mulf %322, %324 : vector<8x128xf32>
    %326 = arith.addf %314, %325 : vector<8x128xf32>
    %c27 = arith.constant 27 : index
    %327 = memref.load %arg2[%c27] : memref<32xf32, #tpu.memory_space<smem>>
    %328 = vector.broadcast %327 : f32 to vector<8x128xf32>
    %329 = arith.mulf %0, %328 : vector<8x128xf32>
    %c27_83 = arith.constant 27 : index
    %330 = memref.load %arg3[%c27_83] : memref<32xf32, #tpu.memory_space<smem>>
    %331 = vector.broadcast %330 : f32 to vector<8x128xf32>
    %332 = arith.addf %329, %331 : vector<8x128xf32>
    %cst_84 = arith.constant 0.000000e+00 : f32
    %333 = vector.broadcast %cst_84 : f32 to vector<8x128xf32>
    %334 = arith.maximumf %332, %333 : vector<8x128xf32>
    %c27_85 = arith.constant 27 : index
    %335 = memref.load %arg4[%c27_85] : memref<32xf32, #tpu.memory_space<smem>>
    %336 = vector.broadcast %335 : f32 to vector<8x128xf32>
    %337 = arith.mulf %334, %336 : vector<8x128xf32>
    %338 = arith.addf %326, %337 : vector<8x128xf32>
    %c28 = arith.constant 28 : index
    %339 = memref.load %arg2[%c28] : memref<32xf32, #tpu.memory_space<smem>>
    %340 = vector.broadcast %339 : f32 to vector<8x128xf32>
    %341 = arith.mulf %0, %340 : vector<8x128xf32>
    %c28_86 = arith.constant 28 : index
    %342 = memref.load %arg3[%c28_86] : memref<32xf32, #tpu.memory_space<smem>>
    %343 = vector.broadcast %342 : f32 to vector<8x128xf32>
    %344 = arith.addf %341, %343 : vector<8x128xf32>
    %cst_87 = arith.constant 0.000000e+00 : f32
    %345 = vector.broadcast %cst_87 : f32 to vector<8x128xf32>
    %346 = arith.maximumf %344, %345 : vector<8x128xf32>
    %c28_88 = arith.constant 28 : index
    %347 = memref.load %arg4[%c28_88] : memref<32xf32, #tpu.memory_space<smem>>
    %348 = vector.broadcast %347 : f32 to vector<8x128xf32>
    %349 = arith.mulf %346, %348 : vector<8x128xf32>
    %350 = arith.addf %338, %349 : vector<8x128xf32>
    %c29 = arith.constant 29 : index
    %351 = memref.load %arg2[%c29] : memref<32xf32, #tpu.memory_space<smem>>
    %352 = vector.broadcast %351 : f32 to vector<8x128xf32>
    %353 = arith.mulf %0, %352 : vector<8x128xf32>
    %c29_89 = arith.constant 29 : index
    %354 = memref.load %arg3[%c29_89] : memref<32xf32, #tpu.memory_space<smem>>
    %355 = vector.broadcast %354 : f32 to vector<8x128xf32>
    %356 = arith.addf %353, %355 : vector<8x128xf32>
    %cst_90 = arith.constant 0.000000e+00 : f32
    %357 = vector.broadcast %cst_90 : f32 to vector<8x128xf32>
    %358 = arith.maximumf %356, %357 : vector<8x128xf32>
    %c29_91 = arith.constant 29 : index
    %359 = memref.load %arg4[%c29_91] : memref<32xf32, #tpu.memory_space<smem>>
    %360 = vector.broadcast %359 : f32 to vector<8x128xf32>
    %361 = arith.mulf %358, %360 : vector<8x128xf32>
    %362 = arith.addf %350, %361 : vector<8x128xf32>
    %c30 = arith.constant 30 : index
    %363 = memref.load %arg2[%c30] : memref<32xf32, #tpu.memory_space<smem>>
    %364 = vector.broadcast %363 : f32 to vector<8x128xf32>
    %365 = arith.mulf %0, %364 : vector<8x128xf32>
    %c30_92 = arith.constant 30 : index
    %366 = memref.load %arg3[%c30_92] : memref<32xf32, #tpu.memory_space<smem>>
    %367 = vector.broadcast %366 : f32 to vector<8x128xf32>
    %368 = arith.addf %365, %367 : vector<8x128xf32>
    %cst_93 = arith.constant 0.000000e+00 : f32
    %369 = vector.broadcast %cst_93 : f32 to vector<8x128xf32>
    %370 = arith.maximumf %368, %369 : vector<8x128xf32>
    %c30_94 = arith.constant 30 : index
    %371 = memref.load %arg4[%c30_94] : memref<32xf32, #tpu.memory_space<smem>>
    %372 = vector.broadcast %371 : f32 to vector<8x128xf32>
    %373 = arith.mulf %370, %372 : vector<8x128xf32>
    %374 = arith.addf %362, %373 : vector<8x128xf32>
    %c31 = arith.constant 31 : index
    %375 = memref.load %arg2[%c31] : memref<32xf32, #tpu.memory_space<smem>>
    %376 = vector.broadcast %375 : f32 to vector<8x128xf32>
    %377 = arith.mulf %0, %376 : vector<8x128xf32>
    %c31_95 = arith.constant 31 : index
    %378 = memref.load %arg3[%c31_95] : memref<32xf32, #tpu.memory_space<smem>>
    %379 = vector.broadcast %378 : f32 to vector<8x128xf32>
    %380 = arith.addf %377, %379 : vector<8x128xf32>
    %cst_96 = arith.constant 0.000000e+00 : f32
    %381 = vector.broadcast %cst_96 : f32 to vector<8x128xf32>
    %382 = arith.maximumf %380, %381 : vector<8x128xf32>
    %c31_97 = arith.constant 31 : index
    %383 = memref.load %arg4[%c31_97] : memref<32xf32, #tpu.memory_space<smem>>
    %384 = vector.broadcast %383 : f32 to vector<8x128xf32>
    %385 = arith.mulf %382, %384 : vector<8x128xf32>
    %386 = arith.addf %374, %385 : vector<8x128xf32>
    %c0_98 = arith.constant 0 : index
    %c0_99 = arith.constant 0 : index
    %387 = vector.load %arg6[%c0_98, %c0_99] : memref<8x128xf32, #tpu.memory_space<vmem>>, vector<8x128xf32>
    tpu.vector_store %arg6[%c0_98, %c0_99], %386 {strides = array<i32>} : memref<8x128xf32, #tpu.memory_space<vmem>>, vector<8x128xf32>,
    return
  }
  func.func @transform_0(%arg0: i32) -> (i32, i32) {
    %c0_i32 = arith.constant 0 : i32
    %c0_i32_0 = arith.constant 0 : i32
    return %arg0, %c0_i32 : i32, i32
  }
  func.func @transform_1(%arg0: i32) -> i32 {
    %c0_i32 = arith.constant 0 : i32
    %c0_i32_0 = arith.constant 0 : i32
    return %c0_i32 : i32
  }
  func.func @transform_2(%arg0: i32) -> i32 {
    %c0_i32 = arith.constant 0 : i32
    %c0_i32_0 = arith.constant 0 : i32
    return %c0_i32 : i32
  }
  func.func @transform_3(%arg0: i32) -> i32 {
    %c0_i32 = arith.constant 0 : i32
    %c0_i32_0 = arith.constant 0 : i32
    return %c0_i32 : i32
  }
  func.func @transform_4(%arg0: i32) -> i32 {
    %c0_i32 = arith.constant 0 : i32
    %c0_i32_0 = arith.constant 0 : i32
    return %c0_i32 : i32
  }
  func.func @transform_5(%arg0: i32) -> (i32, i32) {
    %c0_i32 = arith.constant 0 : i32
    %c0_i32_0 = arith.constant 0 : i32
    return %arg0, %c0_i32 : i32, i32
  }
}

</mosaic_0001>

<llo_original>
// kernel: tpu_custom_call.1
$region0: #{tpu_custom_call.1}
  #allocation0 [shape = 'u32[]', space=smem, size = 0x4, offset = 0x4, fixed_abs, tag = 'smem constant byte address 0x4 - core index']
  #allocation1 [shape = 'u32[72,128]{1,0:T(1,128)}', space=vmem, size = 0x9000, scoped, tag = 'internal scratch']
  #allocation2 [shape = 'f32[1]{0:T(128)S(6)}', space=smem, size = 0x200, scoped, tag = 'scoped memory for tpu_custom_call.1']
  %s0 = inlined_call_operand.hbm [shape: f32[8,128], index: 0, kind: input, shape index: {}]
  %s1 = inlined_call_operand.vmem [shape: f32[32], index: 1, kind: input, shape index: {}]
  %s2 = inlined_call_operand.vmem [shape: f32[32], index: 2, kind: input, shape index: {}]
  %s3 = inlined_call_operand.vmem [shape: f32[32], index: 3, kind: input, shape index: {}]
  %s4 = inlined_call_operand.<no memory space> [shape: f32[1], index: 4, kind: input, shape index: {}]
  %s5 = inlined_call_operand.hbm [shape: f32[8,128], index: 5, kind: output, shape index: {}]
  %s6 = sld [smem:[#allocation0]]
  $region46: #{tpu_custom_call.1} parent=0
    _
  %s8 = ssub.s32 1, %s6
  %s9 = scalar_select 0, %s8, %s6
  %10 = sst [smem:[#allocation2]] %s4
  $region1: #{tpu_custom_call.1} parent=0
    #allocation3 [shape = 'u8[4096]{0}', space=vmem, size = 0x1000, scoped, tag = 'input window, operand 0, single buffered']
    #allocation4 [shape = 's32[1]{0}', space=sflag, size = 0x4, scoped, tag = 'scoped memory for tpu_custom_call.1']
    #allocation5 [shape = 's32[1]{0}', space=sflag, size = 0x4, scoped, tag = 'scoped memory for tpu_custom_call.1']
    #allocation6 [shape = 's32[1]{0}', space=sflag, size = 0x4, scoped, tag = 'scoped memory for tpu_custom_call.1']
    #allocation7 [shape = 'u8[512]{0}', space=smem, size = 0x200, scoped, tag = 'input window, operand 1, single buffered']
    #allocation8 [shape = 'u8[512]{0}', space=smem, size = 0x200, scoped, tag = 'input window, operand 2, single buffered']
    #allocation9 [shape = 's32[1]{0}', space=sflag, size = 0x4, scoped, tag = 'scoped memory for tpu_custom_call.1']
    #allocation10 [shape = 'u8[512]{0}', space=smem, size = 0x200, scoped, tag = 'input window, operand 3, single buffered']
    #allocation11 [shape = 'u8[4096]{0}', space=vmem, size = 0x1000, scoped, tag = 'output window, operand 0, single buffered']
    %11 = vsyncpa [#allocation4], 0
    %12 = vsyncpa [#allocation6], 0
    %13 = vsyncpa [#allocation9], 0
    %14 = vsyncpa [#allocation5], 0
    // Predicated region
    $region2: #{tpu_custom_call.1} parent=1 // pred_check
      _
    $region3: #{tpu_custom_call.1} parent=1 // pred_check_branch
      %16 = sbr.rel (0) target = $region5
    $region4: #{tpu_custom_call.1} parent=1 // pred_region
      %18 = vsyncadd [#allocation4], 0
      %s20 = sshll.u32 %s0, 4
      %s21 = int_to_ptr.hbm [resolvable:$true] %s20
      %s22 = sshll.u32 [#allocation3], 4
      %s23 = int_to_ptr.vmem [resolvable:$true] %s22
      %25 = dma.hbm_to_vmem [thread:$0]  %s21, 128, %s23, [#allocation4]
    $region5: #{tpu_custom_call.1} parent=1 // pred_fallthru
      _
    // Predicated region
    $region6: #{tpu_custom_call.1} parent=1 // pred_check
      _
    $region7: #{tpu_custom_call.1} parent=1 // pred_check_branch
      %27 = sbr.rel (0) target = $region9
    $region8: #{tpu_custom_call.1} parent=1 // pred_region
      %29 = vsyncadd [#allocation6], 0
      %s31 = sshll.u32 %s1, 4
      %s32 = int_to_ptr.vmem [resolvable:$true] %s31
      %34 = dma.vmem_to_smem %s32, 16, [#allocation7], [#allocation6]
    $region9: #{tpu_custom_call.1} parent=1 // pred_fallthru
      _
    // Predicated region
    $region10: #{tpu_custom_call.1} parent=1 // pred_check
      _
    $region11: #{tpu_custom_call.1} parent=1 // pred_check_branch
      %36 = sbr.rel (0) target = $region13
    $region12: #{tpu_custom_call.1} parent=1 // pred_region
      %38 = vsyncadd [#allocation9], 0
      %s40 = sshll.u32 %s2, 4
      %s41 = int_to_ptr.vmem [resolvable:$true] %s40
      %43 = dma.vmem_to_smem %s41, 16, [#allocation8], [#allocation9]
    $region13: #{tpu_custom_call.1} parent=1 // pred_fallthru
      _
    // Predicated region
    $region14: #{tpu_custom_call.1} parent=1 // pred_check
      _
    $region15: #{tpu_custom_call.1} parent=1 // pred_check_branch
      %45 = sbr.rel (0) target = $region17
    $region16: #{tpu_custom_call.1} parent=1 // pred_region
      %47 = vsyncadd [#allocation9], 0
      %s49 = sshll.u32 %s3, 4
      %s50 = int_to_ptr.vmem [resolvable:$true] %s49
      %52 = dma.vmem_to_smem %s50, 16, [#allocation10], [#allocation9]
    $region17: #{tpu_custom_call.1} parent=1 // pred_fallthru
      _
    // Predicated region
    $region18: #{tpu_custom_call.1} parent=1 // pred_check
      _
    $region19: #{tpu_custom_call.1} parent=1 // pred_check_branch
      %54 = sbr.rel (0) target = $region21
    $region20: #{tpu_custom_call.1} parent=1 // pred_region
      _
    $region21: #{tpu_custom_call.1} parent=1 // pred_fallthru
      _
    // Predicated region
    $region22: #{tpu_custom_call.1} parent=1 // pred_check
      _
    $region23: #{tpu_custom_call.1} parent=1 // pred_check_branch
      %56 = sbr.rel (0) target = $region25
    $region24: #{tpu_custom_call.1} parent=1 // pred_region
      %58 = dma.done [#allocation4], 128
    $region25: #{tpu_custom_call.1} parent=1 // pred_fallthru
      _
    // Predicated region
    $region26: #{tpu_custom_call.1} parent=1 // pred_check
      _
    $region27: #{tpu_custom_call.1} parent=1 // pred_check_branch
      %60 = sbr.rel (0) target = $region29
    $region28: #{tpu_custom_call.1} parent=1 // pred_region
      %62 = dma.done [#allocation6], 16
    $region29: #{tpu_custom_call.1} parent=1 // pred_fallthru
      _
    // Predicated region
    $region30: #{tpu_custom_call.1} parent=1 // pred_check
      _
    $region31: #{tpu_custom_call.1} parent=1 // pred_check_branch
      %64 = sbr.rel (0) target = $region33
    $region32: #{tpu_custom_call.1} parent=1 // pred_region
      %66 = dma.done [#allocation9], 16
    $region33: #{tpu_custom_call.1} parent=1 // pred_fallthru
      _
    // Predicated region
    $region34: #{tpu_custom_call.1} parent=1 // pred_check
      _
    $region35: #{tpu_custom_call.1} parent=1 // pred_check_branch
      %68 = sbr.rel (0) target = $region37
    $region36: #{tpu_custom_call.1} parent=1 // pred_region
      %70 = dma.done [#allocation9], 16
    $region37: #{tpu_custom_call.1} parent=1 // pred_fallthru
      _
    %71 = sfence
    %v72 = vld [vmem:[#allocation3] sm:$0xff]
    %s73 = sld [smem:[#allocation2]]
    %v74 = vstv %s73
    %s75 = sld [smem:[#allocation7]]
    %v76 = vstv %s75
    %v77 = vmul.f32 %v72, %v76
    %s78 = sld [smem:[#allocation8]]
    %v79 = vstv %s78
    %v80 = vadd.f32 %v77, %v79
    %v81 = vmax.f32 %v80, 0.0
    %s82 = sld [smem:[#allocation10]]
    %v83 = vstv %s82
    %v84 = vmul.f32 %v81, %v83
    %v85 = vadd.f32 %v74, %v84
    %s86 = sld [smem:[#allocation7 + $0x1]]
    %v87 = vstv %s86
    %v88 = vmul.f32 %v72, %v87
    %s89 = sld [smem:[#allocation8 + $0x1]]
    %v90 = vstv %s89
    %v91 = vadd.f32 %v88, %v90
    %v92 = vmax.f32 %v91, 0.0
    %s93 = sld [smem:[#allocation10 + $0x1]]
    %v94 = vstv %s93
    %v95 = vmul.f32 %v92, %v94
    %v96 = vadd.f32 %v85, %v95
    %s97 = sld [smem:[#allocation7 + $0x2]]
    %v98 = vstv %s97
    %v99 = vmul.f32 %v72, %v98
    %s100 = sld [smem:[#allocation8 + $0x2]]
    %v101 = vstv %s100
    %v102 = vadd.f32 %v99, %v101
    %v103 = vmax.f32 %v102, 0.0
    %s104 = sld [smem:[#allocation10 + $0x2]]
    %v105 = vstv %s104
    %v106 = vmul.f32 %v103, %v105
    %v107 = vadd.f32 %v96, %v106
    %s108 = sld [smem:[#allocation7 + $0x3]]
    %v109 = vstv %s108
    %v110 = vmul.f32 %v72, %v109
    %s111 = sld [smem:[#allocation8 + $0x3]]
    %v112 = vstv %s111
    %v113 = vadd.f32 %v110, %v112
    %v114 = vmax.f32 %v113, 0.0
    %s115 = sld [smem:[#allocation10 + $0x3]]
    %v116 = vstv %s115
    %v117 = vmul.f32 %v114, %v116
    %v118 = vadd.f32 %v107, %v117
    %s119 = sld [smem:[#allocation7 + $0x4]]
    %v120 = vstv %s119
    %v121 = vmul.f32 %v72, %v120
    %s122 = sld [smem:[#allocation8 + $0x4]]
    %v123 = vstv %s122
    %v124 = vadd.f32 %v121, %v123
    %v125 = vmax.f32 %v124, 0.0
    %s126 = sld [smem:[#allocation10 + $0x4]]
    %v127 = vstv %s126
    %v128 = vmul.f32 %v125, %v127
    %v129 = vadd.f32 %v118, %v128
    %s130 = sld [smem:[#allocation7 + $0x5]]
    %v131 = vstv %s130
    %v132 = vmul.f32 %v72, %v131
    %s133 = sld [smem:[#allocation8 + $0x5]]
    %v134 = vstv %s133
    %v135 = vadd.f32 %v132, %v134
    %v136 = vmax.f32 %v135, 0.0
    %s137 = sld [smem:[#allocation10 + $0x5]]
    %v138 = vstv %s137
    %v139 = vmul.f32 %v136, %v138
    %v140 = vadd.f32 %v129, %v139
    %s141 = sld [smem:[#allocation7 + $0x6]]
    %v142 = vstv %s141
    %v143 = vmul.f32 %v72, %v142
    %s144 = sld [smem:[#allocation8 + $0x6]]
    %v145 = vstv %s144
    %v146 = vadd.f32 %v143, %v145
    %v147 = vmax.f32 %v146, 0.0
    %s148 = sld [smem:[#allocation10 + $0x6]]
    %v149 = vstv %s148
    %v150 = vmul.f32 %v147, %v149
    %v151 = vadd.f32 %v140, %v150
    %s152 = sld [smem:[#allocation7 + $0x7]]
    %v153 = vstv %s152
    %v154 = vmul.f32 %v72, %v153
    %s155 = sld [smem:[#allocation8 + $0x7]]
    %v156 = vstv %s155
    %v157 = vadd.f32 %v154, %v156
    %v158 = vmax.f32 %v157, 0.0
    %s159 = sld [smem:[#allocation10 + $0x7]]
    %v160 = vstv %s159
    %v161 = vmul.f32 %v158, %v160
    %v162 = vadd.f32 %v151, %v161
    %s163 = sld [smem:[#allocation7 + $0x8]]
    %v164 = vstv %s163
    %v165 = vmul.f32 %v72, %v164
    %s166 = sld [smem:[#allocation8 + $0x8]]
    %v167 = vstv %s166
    %v168 = vadd.f32 %v165, %v167
    %v169 = vmax.f32 %v168, 0.0
    %s170 = sld [smem:[#allocation10 + $0x8]]
    %v171 = vstv %s170
    %v172 = vmul.f32 %v169, %v171
    %v173 = vadd.f32 %v162, %v172
    %s174 = sld [smem:[#allocation7 + $0x9]]
    %v175 = vstv %s174
    %v176 = vmul.f32 %v72, %v175
    %s177 = sld [smem:[#allocation8 + $0x9]]
    %v178 = vstv %s177
    %v179 = vadd.f32 %v176, %v178
    %v180 = vmax.f32 %v179, 0.0
    %s181 = sld [smem:[#allocation10 + $0x9]]
    %v182 = vstv %s181
    %v183 = vmul.f32 %v180, %v182
    %v184 = vadd.f32 %v173, %v183
    %s185 = sld [smem:[#allocation7 + $0xa]]
    %v186 = vstv %s185
    %v187 = vmul.f32 %v72, %v186
    %s188 = sld [smem:[#allocation8 + $0xa]]
    %v189 = vstv %s188
    %v190 = vadd.f32 %v187, %v189
    %v191 = vmax.f32 %v190, 0.0
    %s192 = sld [smem:[#allocation10 + $0xa]]
    %v193 = vstv %s192
    %v194 = vmul.f32 %v191, %v193
    %v195 = vadd.f32 %v184, %v194
    %s196 = sld [smem:[#allocation7 + $0xb]]
    %v197 = vstv %s196
    %v198 = vmul.f32 %v72, %v197
    %s199 = sld [smem:[#allocation8 + $0xb]]
    %v200 = vstv %s199
    %v201 = vadd.f32 %v198, %v200
    %v202 = vmax.f32 %v201, 0.0
    %s203 = sld [smem:[#allocation10 + $0xb]]
    %v204 = vstv %s203
    %v205 = vmul.f32 %v202, %v204
    %v206 = vadd.f32 %v195, %v205
    %s207 = sld [smem:[#allocation7 + $0xc]]
    %v208 = vstv %s207
    %v209 = vmul.f32 %v72, %v208
    %s210 = sld [smem:[#allocation8 + $0xc]]
    %v211 = vstv %s210
    %v212 = vadd.f32 %v209, %v211
    %v213 = vmax.f32 %v212, 0.0
    %s214 = sld [smem:[#allocation10 + $0xc]]
    %v215 = vstv %s214
    %v216 = vmul.f32 %v213, %v215
    %v217 = vadd.f32 %v206, %v216
    %s218 = sld [smem:[#allocation7 + $0xd]]
    %v219 = vstv %s218
    %v220 = vmul.f32 %v72, %v219
    %s221 = sld [smem:[#allocation8 + $0xd]]
    %v222 = vstv %s221
    %v223 = vadd.f32 %v220, %v222
    %v224 = vmax.f32 %v223, 0.0
    %s225 = sld [smem:[#allocation10 + $0xd]]
    %v226 = vstv %s225
    %v227 = vmul.f32 %v224, %v226
    %v228 = vadd.f32 %v217, %v227
    %s229 = sld [smem:[#allocation7 + $0xe]]
    %v230 = vstv %s229
    %v231 = vmul.f32 %v72, %v230
    %s232 = sld [smem:[#allocation8 + $0xe]]
    %v233 = vstv %s232
    %v234 = vadd.f32 %v231, %v233
    %v235 = vmax.f32 %v234, 0.0
    %s236 = sld [smem:[#allocation10 + $0xe]]
    %v237 = vstv %s236
    %v238 = vmul.f32 %v235, %v237
    %v239 = vadd.f32 %v228, %v238
    %s240 = sld [smem:[#allocation7 + $0xf]]
    %v241 = vstv %s240
    %v242 = vmul.f32 %v72, %v241
    %s243 = sld [smem:[#allocation8 + $0xf]]
    %v244 = vstv %s243
    %v245 = vadd.f32 %v242, %v244
    %v246 = vmax.f32 %v245, 0.0
    %s247 = sld [smem:[#allocation10 + $0xf]]
    %v248 = vstv %s247
    %v249 = vmul.f32 %v246, %v248
    %v250 = vadd.f32 %v239, %v249
    %s251 = sld [smem:[#allocation7 + $0x10]]
    %v252 = vstv %s251
    %v253 = vmul.f32 %v72, %v252
    %s254 = sld [smem:[#allocation8 + $0x10]]
    %v255 = vstv %s254
    %v256 = vadd.f32 %v253, %v255
    %v257 = vmax.f32 %v256, 0.0
    %s258 = sld [smem:[#allocation10 + $0x10]]
    %v259 = vstv %s258
    %v260 = vmul.f32 %v257, %v259
    %v261 = vadd.f32 %v250, %v260
    %s262 = sld [smem:[#allocation7 + $0x11]]
    %v263 = vstv %s262
    %v264 = vmul.f32 %v72, %v263
    %s265 = sld [smem:[#allocation8 + $0x11]]
    %v266 = vstv %s265
    %v267 = vadd.f32 %v264, %v266
    %v268 = vmax.f32 %v267, 0.0
    %s269 = sld [smem:[#allocation10 + $0x11]]
    %v270 = vstv %s269
    %v271 = vmul.f32 %v268, %v270
    %v272 = vadd.f32 %v261, %v271
    %s273 = sld [smem:[#allocation7 + $0x12]]
    %v274 = vstv %s273
    %v275 = vmul.f32 %v72, %v274
    %s276 = sld [smem:[#allocation8 + $0x12]]
    %v277 = vstv %s276
    %v278 = vadd.f32 %v275, %v277
    %v279 = vmax.f32 %v278, 0.0
    %s280 = sld [smem:[#allocation10 + $0x12]]
    %v281 = vstv %s280
    %v282 = vmul.f32 %v279, %v281
    %v283 = vadd.f32 %v272, %v282
    %s284 = sld [smem:[#allocation7 + $0x13]]
    %v285 = vstv %s284
    %v286 = vmul.f32 %v72, %v285
    %s287 = sld [smem:[#allocation8 + $0x13]]
    %v288 = vstv %s287
    %v289 = vadd.f32 %v286, %v288
    %v290 = vmax.f32 %v289, 0.0
    %s291 = sld [smem:[#allocation10 + $0x13]]
    %v292 = vstv %s291
    %v293 = vmul.f32 %v290, %v292
    %v294 = vadd.f32 %v283, %v293
    %s295 = sld [smem:[#allocation7 + $0x14]]
    %v296 = vstv %s295
    %v297 = vmul.f32 %v72, %v296
    %s298 = sld [smem:[#allocation8 + $0x14]]
    %v299 = vstv %s298
    %v300 = vadd.f32 %v297, %v299
    %v301 = vmax.f32 %v300, 0.0
    %s302 = sld [smem:[#allocation10 + $0x14]]
    %v303 = vstv %s302
    %v304 = vmul.f32 %v301, %v303
    %v305 = vadd.f32 %v294, %v304
    %s306 = sld [smem:[#allocation7 + $0x15]]
    %v307 = vstv %s306
    %v308 = vmul.f32 %v72, %v307
    %s309 = sld [smem:[#allocation8 + $0x15]]
    %v310 = vstv %s309
    %v311 = vadd.f32 %v308, %v310
    %v312 = vmax.f32 %v311, 0.0
    %s313 = sld [smem:[#allocation10 + $0x15]]
    %v314 = vstv %s313
    %v315 = vmul.f32 %v312, %v314
    %v316 = vadd.f32 %v305, %v315
    %s317 = sld [smem:[#allocation7 + $0x16]]
    %v318 = vstv %s317
    %v319 = vmul.f32 %v72, %v318
    %s320 = sld [smem:[#allocation8 + $0x16]]
    %v321 = vstv %s320
    %v322 = vadd.f32 %v319, %v321
    %v323 = vmax.f32 %v322, 0.0
    %s324 = sld [smem:[#allocation10 + $0x16]]
    %v325 = vstv %s324
    %v326 = vmul.f32 %v323, %v325
    %v327 = vadd.f32 %v316, %v326
    %s328 = sld [smem:[#allocation7 + $0x17]]
    %v329 = vstv %s328
    %v330 = vmul.f32 %v72, %v329
    %s331 = sld [smem:[#allocation8 + $0x17]]
    %v332 = vstv %s331
    %v333 = vadd.f32 %v330, %v332
    %v334 = vmax.f32 %v333, 0.0
    %s335 = sld [smem:[#allocation10 + $0x17]]
    %v336 = vstv %s335
    %v337 = vmul.f32 %v334, %v336
    %v338 = vadd.f32 %v327, %v337
    %s339 = sld [smem:[#allocation7 + $0x18]]
    %v340 = vstv %s339
    %v341 = vmul.f32 %v72, %v340
    %s342 = sld [smem:[#allocation8 + $0x18]]
    %v343 = vstv %s342
    %v344 = vadd.f32 %v341, %v343
    %v345 = vmax.f32 %v344, 0.0
    %s346 = sld [smem:[#allocation10 + $0x18]]
    %v347 = vstv %s346
    %v348 = vmul.f32 %v345, %v347
    %v349 = vadd.f32 %v338, %v348
    %s350 = sld [smem:[#allocation7 + $0x19]]
    %v351 = vstv %s350
    %v352 = vmul.f32 %v72, %v351
    %s353 = sld [smem:[#allocation8 + $0x19]]
    %v354 = vstv %s353
    %v355 = vadd.f32 %v352, %v354
    %v356 = vmax.f32 %v355, 0.0
    %s357 = sld [smem:[#allocation10 + $0x19]]
    %v358 = vstv %s357
    %v359 = vmul.f32 %v356, %v358
    %v360 = vadd.f32 %v349, %v359
    %s361 = sld [smem:[#allocation7 + $0x1a]]
    %v362 = vstv %s361
    %v363 = vmul.f32 %v72, %v362
    %s364 = sld [smem:[#allocation8 + $0x1a]]
    %v365 = vstv %s364
    %v366 = vadd.f32 %v363, %v365
    %v367 = vmax.f32 %v366, 0.0
    %s368 = sld [smem:[#allocation10 + $0x1a]]
    %v369 = vstv %s368
    %v370 = vmul.f32 %v367, %v369
    %v371 = vadd.f32 %v360, %v370
    %s372 = sld [smem:[#allocation7 + $0x1b]]
    %v373 = vstv %s372
    %v374 = vmul.f32 %v72, %v373
    %s375 = sld [smem:[#allocation8 + $0x1b]]
    %v376 = vstv %s375
    %v377 = vadd.f32 %v374, %v376
    %v378 = vmax.f32 %v377, 0.0
    %s379 = sld [smem:[#allocation10 + $0x1b]]
    %v380 = vstv %s379
    %v381 = vmul.f32 %v378, %v380
    %v382 = vadd.f32 %v371, %v381
    %s383 = sld [smem:[#allocation7 + $0x1c]]
    %v384 = vstv %s383
    %v385 = vmul.f32 %v72, %v384
    %s386 = sld [smem:[#allocation8 + $0x1c]]
    %v387 = vstv %s386
    %v388 = vadd.f32 %v385, %v387
    %v389 = vmax.f32 %v388, 0.0
    %s390 = sld [smem:[#allocation10 + $0x1c]]
    %v391 = vstv %s390
    %v392 = vmul.f32 %v389, %v391
    %v393 = vadd.f32 %v382, %v392
    %s394 = sld [smem:[#allocation7 + $0x1d]]
    %v395 = vstv %s394
    %v396 = vmul.f32 %v72, %v395
    %s397 = sld [smem:[#allocation8 + $0x1d]]
    %v398 = vstv %s397
    %v399 = vadd.f32 %v396, %v398
    %v400 = vmax.f32 %v399, 0.0
    %s401 = sld [smem:[#allocation10 + $0x1d]]
    %v402 = vstv %s401
    %v403 = vmul.f32 %v400, %v402
    %v404 = vadd.f32 %v393, %v403
    %s405 = sld [smem:[#allocation7 + $0x1e]]
    %v406 = vstv %s405
    %v407 = vmul.f32 %v72, %v406
    %s408 = sld [smem:[#allocation8 + $0x1e]]
    %v409 = vstv %s408
    %v410 = vadd.f32 %v407, %v409
    %v411 = vmax.f32 %v410, 0.0
    %s412 = sld [smem:[#allocation10 + $0x1e]]
    %v413 = vstv %s412
    %v414 = vmul.f32 %v411, %v413
    %v415 = vadd.f32 %v404, %v414
    %s416 = sld [smem:[#allocation7 + $0x1f]]
    %v417 = vstv %s416
    %v418 = vmul.f32 %v72, %v417
    %s419 = sld [smem:[#allocation8 + $0x1f]]
    %v420 = vstv %s419
    %v421 = vadd.f32 %v418, %v420
    %v422 = vmax.f32 %v421, 0.0
    %s423 = sld [smem:[#allocation10 + $0x1f]]
    %v424 = vstv %s423
    %v425 = vmul.f32 %v422, %v424
    %v426 = vadd.f32 %v415, %v425
    %427 = vst [vmem:[#allocation11] sm:$0xff] %v426
    // Predicated region
    $region38: #{tpu_custom_call.1} parent=1 // pred_check
      _
    $region39: #{tpu_custom_call.1} parent=1 // pred_check_branch
      %429 = sbr.rel (0) target = $region41
    $region40: #{tpu_custom_call.1} parent=1 // pred_region
      %431 = vsyncadd [#allocation5], 0
      %s433 = sshll.u32 [#allocation11], 4
      %s434 = int_to_ptr.vmem [resolvable:$true] %s433
      %s435 = sshll.u32 %s5, 4
      %s436 = int_to_ptr.hbm [resolvable:$true] %s435
      %438 = dma.vmem_to_hbm [thread:$0]  %s434, 128, %s436, [#allocation5]
    $region41: #{tpu_custom_call.1} parent=1 // pred_fallthru
      _
    // Predicated region
    $region42: #{tpu_custom_call.1} parent=1 // pred_check
      _
    $region43: #{tpu_custom_call.1} parent=1 // pred_check_branch
      %440 = sbr.rel (0) target = $region45
    $region44: #{tpu_custom_call.1} parent=1 // pred_region
      %442 = dma.done [#allocation5], 128
    $region45: #{tpu_custom_call.1} parent=1 // pred_fallthru
      _
    %443 = vsyncpa [#allocation4], 1
    %444 = vsyncpa [#allocation5], 1
    %445 = vsyncpa [#allocation6], 1
    %446 = vsyncpa [#allocation9], 1

</llo_original>
